<compile_context>
chip_gen: v7x
topology: tpu7x:2x2x1
jax: 0.10.0
libtpu: 0.0.40
codegen_flags: <defaults>
</compile_context>

<pallas_src>
import numpy as np
import jax
import jax.numpy as jnp
from jax.experimental import pallas as pl
from jax.experimental.pallas import tpu as pltpu


# --------------------------------------------------------------------------
# kernel
# --------------------------------------------------------------------------
def _make_dino_kernel(ncrops: int, out_dim: int):
    n_loss_terms = 2 * ncrops - 2
    inv_n_terms = 1.0 / float(n_loss_terms)

    def kernel(scalars_ref, student_ref, teacher_ref, center_ref,
               pimg_ref, cpart_ref):
        inv_s_temp = scalars_ref[0]          # 1 / student_temp   (SMEM f32)
        inv_t_temp = scalars_ref[1]          # 1 / teacher_temp   (SMEM f32)

        # ---- teacher: centered, tempered softmax (rows of length D) -------
        teacher = teacher_ref[...].astype(jnp.float32)          # (2, tb, D)
        center = center_ref[...].astype(jnp.float32).reshape(1, 1, out_dim)
        t_logits = (teacher - center) * inv_t_temp
        t_max = jnp.max(t_logits, axis=-1, keepdims=True)
        t_exp = jnp.exp(t_logits - t_max)
        t_den = jnp.sum(t_exp, axis=-1, keepdims=True)
        q = t_exp * pl.reciprocal(t_den, approx=True)            # (2, tb, D)

        # ---- student: tempered log-softmax ---------------------------------
        s = student_ref[...].astype(jnp.float32) * inv_s_temp    # (nc, tb, D)
        s_max = jnp.max(s, axis=-1, keepdims=True)
        s_shift = s - s_max
        lse = jnp.log(jnp.sum(jnp.exp(s_shift), axis=-1, keepdims=True))
        logp = s_shift - lse                                     # (nc, tb, D)

        # ---- strength-reduced cross-entropy over (iq, v!=iq) pairs ---------
        #   sum_{iq} sum_{v!=iq} -q_iq·logp_v  =  sum_{iq} -q_iq·(S - logp_iq)
        logp_sum = logp[0]
        for v in range(1, ncrops):
            logp_sum = logp_sum + logp[v]                        # (tb, D)
        t0 = jnp.sum(q[0] * (logp_sum - logp[0]), axis=-1, keepdims=True)
        t1 = jnp.sum(q[1] * (logp_sum - logp[1]), axis=-1, keepdims=True)
        pimg_ref[...] = -(t0 + t1) * inv_n_terms                 # (tb, 1)

        # ---- per-tile partial column sum of teacher (for center EMA) ------
        t_rows = teacher[0] + teacher[1]                         # (tb, D)
        cpart_ref[...] = jnp.sum(t_rows, axis=0,
                                 keepdims=True).reshape(1, 1, out_dim)

    return kernel


# --------------------------------------------------------------------------
# tiling / builder
# --------------------------------------------------------------------------
def _pick_batch_tile(batch, ncrops, out_dim, itemsize, budget_bytes=12 << 20):
    """Largest batch tile (multiple of 8, divides batch) within a VMEM budget."""
    if batch % 8 != 0:
        return batch                         # single full-extent tile
    best = 8
    for tb in range(8, batch + 1, 8):
        if batch % tb:
            continue
        per_tile = tb * out_dim * ((ncrops + 2) * itemsize * 2   # dbl-buf inputs
                                   + (ncrops + 4) * 4)           # f32 temps
        if per_tile <= budget_bytes:
            best = tb
    return best


def _build_dino_runner(ncrops, batch, out_dim, tb, center_momentum, in_dtype):
    num_tiles = batch // tb
    kernel = _make_dino_kernel(ncrops, out_dim)

    itemsize = jnp.dtype(in_dtype).itemsize
    per_tile = tb * out_dim * ((ncrops + 2) * itemsize * 2 + (ncrops + 4) * 4)
    # explicit scoped-VMEM budget, kept well under v7x's 64 MiB physical VMEM
    vmem_limit = int(min(max(per_tile * 3 // 2 + (2 << 20), 4 << 20), 48 << 20))

    pcall = pl.pallas_call(
        kernel,
        grid=(num_tiles,),
        out_shape=(
            jax.ShapeDtypeStruct((batch, 1), jnp.float32),            # per-image loss
            jax.ShapeDtypeStruct((num_tiles, 1, out_dim), jnp.float32),  # center partials
        ),
        in_specs=[
            pl.BlockSpec(memory_space=pltpu.MemorySpace.SMEM),        # scalars (2,)
            pl.BlockSpec((ncrops, tb, out_dim), lambda i: (0, i, 0)),  # student
            pl.BlockSpec((2, tb, out_dim), lambda i: (0, i, 0)),       # teacher
            pl.BlockSpec((1, out_dim), lambda i: (0, 0)),              # center
        ],
        out_specs=(
            pl.BlockSpec((tb, 1), lambda i: (i, 0)),
            pl.BlockSpec((1, 1, out_dim), lambda i: (i, 0, 0)),
        ),
        compiler_params=pltpu.CompilerParams(
            dimension_semantics=("parallel",),
            vmem_limit_bytes=vmem_limit,
        ),
    )

    inv_teacher_rows = 1.0 / float(2 * batch)

    @jax.jit
    def run(scalars, student, teacher, center):
        student3 = student.reshape(ncrops, batch, out_dim)   # crop-major chunks
        teacher3 = teacher.reshape(2, batch, out_dim)
        pimg2, cpart = pcall(scalars, student3, teacher3, center)
        pimg = pimg2[:, 0]                                   # (B,)
        total = jnp.mean(pimg)
        batch_center = jnp.sum(cpart, axis=0) * inv_teacher_rows      # (1, D)
        new_center = (center * center_momentum
                      + batch_center * (1.0 - center_momentum))
        return total, pimg, new_center

    return run


# --------------------------------------------------------------------------
# module wrapper
# --------------------------------------------------------------------------
class DINOLossPallas:
    """Pallas port of DINOLoss (forward + EMA center update)."""

    def __init__(self, out_dim, ncrops, warmup_teacher_temp, teacher_temp,
                 warmup_teacher_temp_epochs, nepochs,
                 student_temp=0.1, center_momentum=0.9, batch_tile=None):
        assert ncrops >= 2
        self.out_dim = out_dim
        self.ncrops = ncrops
        self.student_temp = float(student_temp)
        self.center_momentum = float(center_momentum)
        self.batch_tile = batch_tile
        self.center = jnp.zeros((1, out_dim), dtype=jnp.float32)
        self.teacher_temp_schedule = np.concatenate((
            np.linspace(warmup_teacher_temp, teacher_temp,
                        warmup_teacher_temp_epochs),
            np.ones(nepochs - warmup_teacher_temp_epochs) * teacher_temp,
        )).astype(np.float32)
        self._runners = {}          # (batch, sdtype, tdtype) -> jitted runner

    def _get_runner(self, batch, sdtype, tdtype):
        key = (batch, str(sdtype), str(tdtype))
        if key not in self._runners:
            if self.batch_tile is not None:
                tb = self.batch_tile
                assert batch % tb == 0 and (tb % 8 == 0 or tb == batch)
            else:
                tb = _pick_batch_tile(batch, self.ncrops, self.out_dim,
                                      jnp.dtype(sdtype).itemsize)
            self._runners[key] = _build_dino_runner(
                self.ncrops, batch, self.out_dim, tb,
                self.center_momentum, sdtype)
        return self._runners[key]

    def __call__(self, student_output, teacher_output, epoch):
        batch = student_output.shape[0] // self.ncrops
        assert teacher_output.shape == (2 * batch, self.out_dim)

        # TODO(synk): epoch must be a concrete Python int (host-side schedule
        # lookup, same as the PyTorch module); traced epochs are unsupported.
        temp = float(self.teacher_temp_schedule[int(epoch)])
        scalars = jnp.array([1.0 / self.student_temp, 1.0 / temp],
                            dtype=jnp.float32)

        run = self._get_runner(batch, student_output.dtype,
                               teacher_output.dtype)
        total, pimg, new_center = run(scalars, student_output,
                                      teacher_output, self.center)
        self.center = new_center         # buffer update (register_buffer)
        return total, pimg


# --------------------------------------------------------------------------
# pure-JAX reference (sanity check)
# --------------------------------------------------------------------------
def _reference(student_output, teacher_output, epoch, center, ncrops,
               student_temp, schedule, center_momentum):
    batch = student_output.shape[0] // ncrops
    s = student_output.astype(jnp.float32) / student_temp
    t = teacher_output.astype(jnp.float32)
    temp = float(schedule[int(epoch)])
    q_all = jax.nn.softmax((t - center) / temp, axis=-1)
    logp_all = jax.nn.log_softmax(s, axis=-1)
    total = 0.0
    pimg = jnp.zeros((batch,), jnp.float32)
    n = 0
    for iq in range(2):
        q = q_all[iq * batch:(iq + 1) * batch]
        for v in range(ncrops):
            if v == iq:
                continue
            loss = jnp.sum(-q * logp_all[v * batch:(v + 1) * batch], axis=-1)
            pimg = pimg + loss
            total = total + loss.mean()
            n += 1
    new_center = (center * center_momentum
                  + (t.sum(0, keepdims=True) / (2 * batch))
                  * (1.0 - center_momentum))
    return total / n, pimg / n, new_center


if __name__ == "__main__":
    out_dim = 256
    ncrops = 4
    batch = 16          # images per crop chunk -> grid of 2 tiles (tb=8)
    nepochs = 10
    epoch = 2

    loss_mod = DINOLossPallas(
        out_dim=out_dim, ncrops=ncrops,
        warmup_teacher_temp=0.04, teacher_temp=0.07,
        warmup_teacher_temp_epochs=3, nepochs=nepochs,
        student_temp=0.1, center_momentum=0.9,
        batch_tile=8,
    )

    key = jax.random.PRNGKey(0)
    k1, k2 = jax.random.split(key)
    # native bf16 inputs: kernel casts to f32 internally (halves HBM traffic)
    student_output = jax.random.normal(
        k1, (ncrops * batch, out_dim), jnp.float32).astype(jnp.bfloat16)
    teacher_output = jax.random.normal(
        k2, (2 * batch, out_dim), jnp.float32).astype(jnp.bfloat16)

    init_center = loss_mod.center
    total_loss, loss_pimg = loss_mod(student_output, teacher_output, epoch)
    total_loss = jax.block_until_ready(total_loss)
    loss_pimg = jax.block_until_ready(loss_pimg)
    new_center = jax.block_until_ready(loss_mod.center)

    ref_total, ref_pimg, ref_center = _reference(
        student_output, teacher_output, epoch, init_center, ncrops,
        0.1, loss_mod.teacher_temp_schedule, 0.9)

    # approx=True reciprocal in the teacher softmax -> slightly looser tolerances
    assert jnp.allclose(total_loss, ref_total, rtol=2e-2, atol=1e-2), \
        (total_loss, ref_total)
    assert jnp.allclose(loss_pimg, ref_pimg, rtol=2e-2, atol=1e-2)
    assert jnp.allclose(new_center, ref_center, rtol=1e-4, atol=1e-4)

    # second step: same shapes -> reuses the cached jitted pallas_call
    _ = loss_mod(student_output, teacher_output, epoch + 1)
    jax.block_until_ready(loss_mod.center)

    print("KERNEL_OK")
</pallas_src>

<mosaic_0001>
module attributes {stable_mosaic.version = 11 : i64} {
  func.func @kernel(%arg0: i32, %arg1: memref<2xf32, #tpu.memory_space<smem>>, %arg2: memref<4x8x256xbf16, #tpu.memory_space<vmem>>, %arg3: memref<2x8x256xbf16, #tpu.memory_space<vmem>>, %arg4: memref<1x256xf32, #tpu.memory_space<vmem>>, %arg5: memref<8x1xf32, #tpu.memory_space<vmem>>, %arg6: memref<1x1x256xf32, #tpu.memory_space<vmem>>) attributes {dimension_semantics = [#tpu.dimension_semantics<parallel>], iteration_bounds = array<i64: 2>, scalar_prefetch = 0 : i64, scratch_operands = 0 : i64, tpu.core_type = #tpu.core_type<tc>, window_params = [{transform_indices = @transform_0, window_bounds = array<i64: 2>}, {transform_indices = @transform_1, window_bounds = array<i64: 4, 8, 256>}, {transform_indices = @transform_2, window_bounds = array<i64: 2, 8, 256>}, {pipeline_mode = #tpu.pipeline_mode<synchronous>, transform_indices = @transform_3, window_bounds = array<i64: 1, 256>}, {transform_indices = @transform_4, window_bounds = array<i64: 8, 1>}, {transform_indices = @transform_5, window_bounds = array<i64: 1, 1, 256>}]} {
    %c0 = arith.constant 0 : index
    %0 = memref.load %arg1[%c0] : memref<2xf32, #tpu.memory_space<smem>>
    %c1 = arith.constant 1 : index
    %1 = memref.load %arg1[%c1] : memref<2xf32, #tpu.memory_space<smem>>
    %c0_0 = arith.constant 0 : index
    %c0_1 = arith.constant 0 : index
    %c0_2 = arith.constant 0 : index
    %2 = vector.load %arg3[%c0_0, %c0_1, %c0_2] : memref<2x8x256xbf16, #tpu.memory_space<vmem>>, vector<2x8x256xbf16>
    %3 = arith.extf %2 : vector<2x8x256xbf16> to vector<2x8x256xf32>
    %c0_3 = arith.constant 0 : index
    %c0_4 = arith.constant 0 : index
    %4 = vector.load %arg4[%c0_3, %c0_4] : memref<1x256xf32, #tpu.memory_space<vmem>>, vector<1x256xf32>
    %5 = vector.shape_cast %4 : vector<1x256xf32> to vector<1x1x256xf32>
    %6 = vector.broadcast %5 : vector<1x1x256xf32> to vector<2x8x256xf32>
    %7 = arith.subf %3, %6 : vector<2x8x256xf32>
    %8 = vector.broadcast %1 : f32 to vector<2x8x256xf32>
    %9 = arith.mulf %7, %8 : vector<2x8x256xf32>
    %cst = arith.constant dense<0xFF800000> : vector<2x8xf32>
    %10 = vector.multi_reduction <maximumf>, %9, %cst [2] : vector<2x8x256xf32> to vector<2x8xf32>
    %11 = vector.shape_cast %10 : vector<2x8xf32> to vector<2x8x1xf32>
    %12 = vector.broadcast %11 : vector<2x8x1xf32> to vector<2x8x256xf32>
    %13 = arith.subf %9, %12 : vector<2x8x256xf32>
    %14 = math.exp %13 : vector<2x8x256xf32>
    %cst_5 = arith.constant dense<0.000000e+00> : vector<2x8xf32>
    %15 = vector.multi_reduction <add>, %14, %cst_5 [2] : vector<2x8x256xf32> to vector<2x8xf32>
    %16 = vector.shape_cast %15 : vector<2x8xf32> to vector<2x8x1xf32>
    %17 = tpu.reciprocal %16 {approx = true} : vector<2x8x1xf32> -> vector<2x8x1xf32>
    %18 = vector.broadcast %17 : vector<2x8x1xf32> to vector<2x8x256xf32>
    %19 = arith.mulf %14, %18 : vector<2x8x256xf32>
    %c0_6 = arith.constant 0 : index
    %c0_7 = arith.constant 0 : index
    %c0_8 = arith.constant 0 : index
    %20 = vector.load %arg2[%c0_6, %c0_7, %c0_8] : memref<4x8x256xbf16, #tpu.memory_space<vmem>>, vector<4x8x256xbf16>
    %21 = arith.extf %20 : vector<4x8x256xbf16> to vector<4x8x256xf32>
    %22 = vector.broadcast %0 : f32 to vector<4x8x256xf32>
    %23 = arith.mulf %21, %22 : vector<4x8x256xf32>
    %cst_9 = arith.constant dense<0xFF800000> : vector<4x8xf32>
    %24 = vector.multi_reduction <maximumf>, %23, %cst_9 [2] : vector<4x8x256xf32> to vector<4x8xf32>
    %25 = vector.shape_cast %24 : vector<4x8xf32> to vector<4x8x1xf32>
    %26 = vector.broadcast %25 : vector<4x8x1xf32> to vector<4x8x256xf32>
    %27 = arith.subf %23, %26 : vector<4x8x256xf32>
    %28 = math.exp %27 : vector<4x8x256xf32>
    %cst_10 = arith.constant dense<0.000000e+00> : vector<4x8xf32>
    %29 = vector.multi_reduction <add>, %28, %cst_10 [2] : vector<4x8x256xf32> to vector<4x8xf32>
    %30 = vector.shape_cast %29 : vector<4x8xf32> to vector<4x8x1xf32>
    %31 = math.log %30 : vector<4x8x1xf32>
    %32 = vector.broadcast %31 : vector<4x8x1xf32> to vector<4x8x256xf32>
    %33 = arith.subf %27, %32 : vector<4x8x256xf32>
    %34 = vector.extract_strided_slice %33 {offsets = [0, 0, 0], sizes = [1, 8, 256], strides = [1, 1, 1]} : vector<4x8x256xf32> to vector<1x8x256xf32>
    %35 = vector.shape_cast %34 : vector<1x8x256xf32> to vector<8x256xf32>
    %36 = vector.extract_strided_slice %33 {offsets = [1, 0, 0], sizes = [1, 8, 256], strides = [1, 1, 1]} : vector<4x8x256xf32> to vector<1x8x256xf32>
    %37 = vector.shape_cast %36 : vector<1x8x256xf32> to vector<8x256xf32>
    %38 = arith.addf %35, %37 : vector<8x256xf32>
    %39 = vector.extract_strided_slice %33 {offsets = [2, 0, 0], sizes = [1, 8, 256], strides = [1, 1, 1]} : vector<4x8x256xf32> to vector<1x8x256xf32>
    %40 = vector.shape_cast %39 : vector<1x8x256xf32> to vector<8x256xf32>
    %41 = arith.addf %38, %40 : vector<8x256xf32>
    %42 = vector.extract_strided_slice %33 {offsets = [3, 0, 0], sizes = [1, 8, 256], strides = [1, 1, 1]} : vector<4x8x256xf32> to vector<1x8x256xf32>
    %43 = vector.shape_cast %42 : vector<1x8x256xf32> to vector<8x256xf32>
    %44 = arith.addf %41, %43 : vector<8x256xf32>
    %45 = vector.extract_strided_slice %19 {offsets = [0, 0, 0], sizes = [1, 8, 256], strides = [1, 1, 1]} : vector<2x8x256xf32> to vector<1x8x256xf32>
    %46 = vector.shape_cast %45 : vector<1x8x256xf32> to vector<8x256xf32>
    %47 = vector.extract_strided_slice %33 {offsets = [0, 0, 0], sizes = [1, 8, 256], strides = [1, 1, 1]} : vector<4x8x256xf32> to vector<1x8x256xf32>
    %48 = vector.shape_cast %47 : vector<1x8x256xf32> to vector<8x256xf32>
    %49 = arith.subf %44, %48 : vector<8x256xf32>
    %50 = arith.mulf %46, %49 : vector<8x256xf32>
    %cst_11 = arith.constant dense<0.000000e+00> : vector<8xf32>
    %51 = vector.multi_reduction <add>, %50, %cst_11 [1] : vector<8x256xf32> to vector<8xf32>
    %52 = vector.shape_cast %51 : vector<8xf32> to vector<8x1xf32>
    %53 = vector.extract_strided_slice %19 {offsets = [1, 0, 0], sizes = [1, 8, 256], strides = [1, 1, 1]} : vector<2x8x256xf32> to vector<1x8x256xf32>
    %54 = vector.shape_cast %53 : vector<1x8x256xf32> to vector<8x256xf32>
    %55 = vector.extract_strided_slice %33 {offsets = [1, 0, 0], sizes = [1, 8, 256], strides = [1, 1, 1]} : vector<4x8x256xf32> to vector<1x8x256xf32>
    %56 = vector.shape_cast %55 : vector<1x8x256xf32> to vector<8x256xf32>
    %57 = arith.subf %44, %56 : vector<8x256xf32>
    %58 = arith.mulf %54, %57 : vector<8x256xf32>
    %cst_12 = arith.constant dense<0.000000e+00> : vector<8xf32>
    %59 = vector.multi_reduction <add>, %58, %cst_12 [1] : vector<8x256xf32> to vector<8xf32>
    %60 = vector.shape_cast %59 : vector<8xf32> to vector<8x1xf32>
    %61 = arith.addf %52, %60 : vector<8x1xf32>
    %cst_13 = arith.constant 0.000000e+00 : f32
    %62 = vector.broadcast %cst_13 : f32 to vector<8x1xf32>
    %63 = arith.subf %62, %61 : vector<8x1xf32>
    %cst_14 = arith.constant 0.166666672 : f32
    %64 = vector.broadcast %cst_14 : f32 to vector<8x1xf32>
    %65 = arith.mulf %63, %64 : vector<8x1xf32>
    %c0_15 = arith.constant 0 : index
    %c0_16 = arith.constant 0 : index
    %66 = vector.load %arg5[%c0_15, %c0_16] : memref<8x1xf32, #tpu.memory_space<vmem>>, vector<8x1xf32>
    tpu.vector_store %arg5[%c0_15, %c0_16], %65 {strides = array<i32>} : memref<8x1xf32, #tpu.memory_space<vmem>>, vector<8x1xf32>,
    %67 = vector.extract_strided_slice %3 {offsets = [0, 0, 0], sizes = [1, 8, 256], strides = [1, 1, 1]} : vector<2x8x256xf32> to vector<1x8x256xf32>
    %68 = vector.shape_cast %67 : vector<1x8x256xf32> to vector<8x256xf32>
    %69 = vector.extract_strided_slice %3 {offsets = [1, 0, 0], sizes = [1, 8, 256], strides = [1, 1, 1]} : vector<2x8x256xf32> to vector<1x8x256xf32>
    %70 = vector.shape_cast %69 : vector<1x8x256xf32> to vector<8x256xf32>
    %71 = arith.addf %68, %70 : vector<8x256xf32>
    %cst_17 = arith.constant dense<0.000000e+00> : vector<256xf32>
    %72 = vector.multi_reduction <add>, %71, %cst_17 [0] : vector<8x256xf32> to vector<256xf32>
    %73 = vector.shape_cast %72 : vector<256xf32> to vector<1x256xf32>
    %74 = vector.shape_cast %73 : vector<1x256xf32> to vector<1x1x256xf32>
    %c0_18 = arith.constant 0 : index
    %c0_19 = arith.constant 0 : index
    %c0_20 = arith.constant 0 : index
    %75 = vector.load %arg6[%c0_18, %c0_19, %c0_20] : memref<1x1x256xf32, #tpu.memory_space<vmem>>, vector<1x1x256xf32>
    tpu.vector_store %arg6[%c0_18, %c0_19, %c0_20], %74 {strides = array<i32>} : memref<1x1x256xf32, #tpu.memory_space<vmem>>, vector<1x1x256xf32>,
    return
  }
  func.func @transform_0(%arg0: i32) -> i32 {
    %c0_i32 = arith.constant 0 : i32
    %c0_i32_0 = arith.constant 0 : i32
    return %c0_i32 : i32
  }
  func.func @transform_1(%arg0: i32) -> (i32, i32, i32) {
    %c0_i32 = arith.constant 0 : i32
    %c0_i32_0 = arith.constant 0 : i32
    %c0_i32_1 = arith.constant 0 : i32
    return %c0_i32, %arg0, %c0_i32_0 : i32, i32, i32
  }
  func.func @transform_2(%arg0: i32) -> (i32, i32, i32) {
    %c0_i32 = arith.constant 0 : i32
    %c0_i32_0 = arith.constant 0 : i32
    %c0_i32_1 = arith.constant 0 : i32
    return %c0_i32, %arg0, %c0_i32_0 : i32, i32, i32
  }
  func.func @transform_3(%arg0: i32) -> (i32, i32) {
    %c0_i32 = arith.constant 0 : i32
    %c0_i32_0 = arith.constant 0 : i32
    %c0_i32_1 = arith.constant 0 : i32
    return %c0_i32, %c0_i32_0 : i32, i32
  }
  func.func @transform_4(%arg0: i32) -> (i32, i32) {
    %c0_i32 = arith.constant 0 : i32
    %c0_i32_0 = arith.constant 0 : i32
    return %arg0, %c0_i32 : i32, i32
  }
  func.func @transform_5(%arg0: i32) -> (i32, i32, i32) {
    %c0_i32 = arith.constant 0 : i32
    %c0_i32_0 = arith.constant 0 : i32
    %c0_i32_1 = arith.constant 0 : i32
    return %arg0, %c0_i32, %c0_i32_0 : i32, i32, i32
  }
}

</mosaic_0001>

<llo_original>
// kernel: run.1
$region0: #{run.1}
  #allocation0 [shape = 'u32[]', space=smem, size = 0x4, offset = 0x4, fixed_abs, tag = 'smem constant byte address 0x4 - core index']
  #allocation1 [shape = 'u32[144,128]{1,0:T(1,128)}', space=vmem, size = 0x12000, scoped, tag = 'internal scratch']
  %s0 = inlined_call_operand.vmem [shape: f32[2], index: 0, kind: input, shape index: {}]
  %s1 = inlined_call_operand.hbm [shape: bf16[4,16,256], index: 1, kind: input, shape index: {}]
  %s2 = inlined_call_operand.hbm [shape: bf16[2,16,256], index: 2, kind: input, shape index: {}]
  %s3 = inlined_call_operand.vmem [shape: f32[1,256], index: 3, kind: input, shape index: {}]
  %s4 = inlined_call_operand.vmem [shape: f32[16,1], index: 4, kind: output, shape index: {0}]
  %s5 = inlined_call_operand.vmem [shape: f32[2,1,256], index: 5, kind: output, shape index: {1}]
  %6 = xla_tuple %s4, %s5
  %s7 = sld [smem:[#allocation0]]
  $region69: #{run.1} parent=0
    _
  %s9 = ssub.s32 1, %s7
  %s10 = scalar_select 0, %s9, %s7
  $region1: #{run.1} parent=0
    #allocation2 [shape = 'u8[512]{0}', space=smem, size = 0x200, scoped, tag = 'input window, operand 0, single buffered']
    #allocation3 [shape = 's32[2]{0}', space=sflag, size = 0x8, scoped, tag = 'scoped memory for run.1']
    #allocation4 [shape = 's32[2]{0}', space=sflag, size = 0x8, scoped, tag = 'scoped memory for run.1']
    #allocation5 [shape = 'u8[32768]{0}', space=vmem, size = 0x8000, scoped, tag = 'input window, operand 1']
    #allocation6 [shape = 'u8[16384]{0}', space=vmem, size = 0x4000, scoped, tag = 'input window, operand 2']
    #allocation7 [shape = 's32[2]{0}', space=sflag, size = 0x8, scoped, tag = 'scoped memory for run.1']
    %11 = vsyncpa [#allocation4], 0
    %12 = vsyncpa [#allocation3], 0
    %s13 = scalar_lea.sflag [#allocation3], 1
    %14 = vsyncpa %s13, 0
    %15 = vsyncpa [#allocation7], 0
    %s16 = scalar_lea.sflag [#allocation7], 1
    %17 = vsyncpa %s16, 0
    loop: start=0, step=1, limit=4
    $region2: #{run.1} parent=1 // loop_pre_header
      _
    $region3: #{run.1} parent=1 // loop_header
      %s19 = sphi 0, %s23
      %p20 = scmp.ge.s32.totalorder %s19, 4
      %s27 = sphi 0, %s27
      %s29 = sphi 0, %s27
      %s30 = sphi 0, %s29
      %s44 = sphi 0, %s30
      %s50 = sphi 0, %s52
      %s53 = sphi 0, %s50
      %s54 = sphi 0, %s53
      %s70 = sphi 0, %s54
      %s76 = sphi 0, %s78
      %s79 = sphi 0, %s76
      %s80 = sphi 0, %s79
      %s96 = sphi 0, %s80
      %s100 = sphi 0, %s100
      %s102 = sphi 0, %s100
      %s103 = sphi 0, %s102
      %s117 = sphi 0, %s103
      %s123 = sphi 0, %s125
      %s126 = sphi 0, %s123
      %s127 = sphi 0, %s126
      %s143 = sphi 0, %s127
      %s149 = sphi 0, %s151
      %s152 = sphi 0, %s149
      %s153 = sphi 0, %s152
      %s169 = sphi 0, %s153
    $region4: #{run.1} parent=1 // loop_header_branch
      %22 = sbr.rel (%p20) target = $region8
    $region5: #{run.1} parent=1 // loop_body
      %s24 = ssub.s32 %s19, 1
      %s25 = ssub.s32 %s19, 2
      %s26 = sadd.s32 %s19, 1
      %s28 = sadd.s32 %s27, 1
      %p31 = scmp.eq.s32.totalorder %s19, 1
      %p32 = scmp.ne.s32.totalorder %s27, %s29
      %p33 = scmp.eq.s32.totalorder %s19, 0
      %p34 = por %p32, %p33
      %p35 = scmp.ne.s32.totalorder %s27, %s29
      %p36 = scmp.eq.s32.totalorder %s24, 1
      %p37 = por %p35, %p36
      %p38 = scmp.ne.s32.totalorder %s29, %s30
      %p39 = scmp.eq.s32.totalorder %s24, 0
      %p40 = por %p38, %p39
      %p41 = scmp.ne.s32.totalorder %s29, %s30
      %p42 = scmp.eq.s32.totalorder %s25, 1
      %p43 = por %p41, %p42
      %p45 = scmp.ne.s32.totalorder %s30, %s44
      %p46 = scmp.eq.s32.totalorder %s25, 0
      %p47 = por %p45, %p46
      %s48 = ssub.s32 %s19, %s26
      %p49 = scmp.eq.s32.totalorder %s48, 0
      %s51 = sadd.s32 %s50, 1
      %s52 = scalar_select %p49, %s50, %s51
      %p55 = pneg %p49
      %p56 = scmp.eq.s32.totalorder %s19, 1
      %p57 = por %p55, %p56
      %p58 = scmp.ne.s32.totalorder %s50, %s53
      %p59 = scmp.eq.s32.totalorder %s19, 0
      %p60 = por %p58, %p59
      %p61 = scmp.ne.s32.totalorder %s50, %s53
      %p62 = scmp.eq.s32.totalorder %s24, 1
      %p63 = por %p61, %p62
      %p64 = scmp.ne.s32.totalorder %s53, %s54
      %p65 = scmp.eq.s32.totalorder %s24, 0
      %p66 = por %p64, %p65
      %p67 = scmp.ne.s32.totalorder %s53, %s54
      %p68 = scmp.eq.s32.totalorder %s25, 1
      %p69 = por %p67, %p68
      %p71 = scmp.ne.s32.totalorder %s54, %s70
      %p72 = scmp.eq.s32.totalorder %s25, 0
      %p73 = por %p71, %p72
      %s74 = ssub.s32 %s19, %s26
      %p75 = scmp.eq.s32.totalorder %s74, 0
      %s77 = sadd.s32 %s76, 1
      %s78 = scalar_select %p75, %s76, %s77
      %p81 = pneg %p75
      %p82 = scmp.eq.s32.totalorder %s19, 1
      %p83 = por %p81, %p82
      %p84 = scmp.ne.s32.totalorder %s76, %s79
      %p85 = scmp.eq.s32.totalorder %s19, 0
      %p86 = por %p84, %p85
      %p87 = scmp.ne.s32.totalorder %s76, %s79
      %p88 = scmp.eq.s32.totalorder %s24, 1
      %p89 = por %p87, %p88
      %p90 = scmp.ne.s32.totalorder %s79, %s80
      %p91 = scmp.eq.s32.totalorder %s24, 0
      %p92 = por %p90, %p91
      %p93 = scmp.ne.s32.totalorder %s79, %s80
      %p94 = scmp.eq.s32.totalorder %s25, 1
      %p95 = por %p93, %p94
      %p97 = scmp.ne.s32.totalorder %s80, %s96
      %p98 = scmp.eq.s32.totalorder %s25, 0
      %p99 = por %p97, %p98
      %s101 = sadd.s32 %s100, 1
      %p104 = scmp.eq.s32.totalorder %s19, 1
      %p105 = scmp.ne.s32.totalorder %s100, %s102
      %p106 = scmp.eq.s32.totalorder %s19, 0
      %p107 = por %p105, %p106
      %p108 = scmp.ne.s32.totalorder %s100, %s102
      %p109 = scmp.eq.s32.totalorder %s24, 1
      %p110 = por %p108, %p109
      %p111 = scmp.ne.s32.totalorder %s102, %s103
      %p112 = scmp.eq.s32.totalorder %s24, 0
      %p113 = por %p111, %p112
      %p114 = scmp.ne.s32.totalorder %s102, %s103
      %p115 = scmp.eq.s32.totalorder %s25, 1
      %p116 = por %p114, %p115
      %p118 = scmp.ne.s32.totalorder %s103, %s117
      %p119 = scmp.eq.s32.totalorder %s25, 0
      %p120 = por %p118, %p119
      %s121 = ssub.s32 %s19, %s26
      %p122 = scmp.eq.s32.totalorder %s121, 0
      %s124 = sadd.s32 %s123, 1
      %s125 = scalar_select %p122, %s123, %s124
      %p128 = pneg %p122
      %p129 = scmp.eq.s32.totalorder %s19, 1
      %p130 = por %p128, %p129
      %p131 = scmp.ne.s32.totalorder %s123, %s126
      %p132 = scmp.eq.s32.totalorder %s19, 0
      %p133 = por %p131, %p132
      %p134 = scmp.ne.s32.totalorder %s123, %s126
      %p135 = scmp.eq.s32.totalorder %s24, 1
      %p136 = por %p134, %p135
      %p137 = scmp.ne.s32.totalorder %s126, %s127
      %p138 = scmp.eq.s32.totalorder %s24, 0
      %p139 = por %p137, %p138
      %p140 = scmp.ne.s32.totalorder %s126, %s127
      %p141 = scmp.eq.s32.totalorder %s25, 1
      %p142 = por %p140, %p141
      %p144 = scmp.ne.s32.totalorder %s127, %s143
      %p145 = scmp.eq.s32.totalorder %s25, 0
      %p146 = por %p144, %p145
      %s147 = ssub.s32 %s19, %s26
      %p148 = scmp.eq.s32.totalorder %s147, 0
      %s150 = sadd.s32 %s149, 1
      %s151 = scalar_select %p148, %s149, %s150
      %p154 = pneg %p148
      %p155 = scmp.eq.s32.totalorder %s19, 1
      %p156 = por %p154, %p155
      %p157 = scmp.ne.s32.totalorder %s149, %s152
      %p158 = scmp.eq.s32.totalorder %s19, 0
      %p159 = por %p157, %p158
      %p160 = scmp.ne.s32.totalorder %s149, %s152
      %p161 = scmp.eq.s32.totalorder %s24, 1
      %p162 = por %p160, %p161
      %p163 = scmp.ne.s32.totalorder %s152, %s153
      %p164 = scmp.eq.s32.totalorder %s24, 0
      %p165 = por %p163, %p164
      %p166 = scmp.ne.s32.totalorder %s152, %s153
      %p167 = scmp.eq.s32.totalorder %s25, 1
      %p168 = por %p166, %p167
      %p170 = scmp.ne.s32.totalorder %s153, %s169
      %p171 = scmp.eq.s32.totalorder %s25, 0
      %p172 = por %p170, %p171
      %p173 = scmp.le.s32.totalorder 1, %s19
      %p174 = scmp.lt.s32.totalorder %s19, 3
      %p175 = pnand %p173, %p174
      %p176 = pneg %p175
      // Predicated region
      $region9: #{run.1} parent=5 // pred_check
        _
      $region10: #{run.1} parent=5 // pred_check_branch
        %178 = sbr.rel (%p175) target = $region12
      $region11: #{run.1} parent=5 // pred_region
        %s179 = ssub.s32 %s19, 1
        // Predicated region
        $region13: #{run.1} parent=11 // pred_check
          %p180 = pneg %p40
        $region14: #{run.1} parent=11 // pred_check_branch
          %182 = sbr.rel (%p180) target = $region16
        $region15: #{run.1} parent=11 // pred_region
          %s184 = ssub.s32 16, 16
          %185 = vsyncadd [#allocation4], %s184
          %s187 = sshll.u32 %s0, 4
          %s188 = int_to_ptr.vmem [resolvable:$true] %s187
          %190 = dma.vmem_to_smem %s188, 16, [#allocation2], [#allocation4]
        $region16: #{run.1} parent=11 // pred_fallthru
          _
        // Predicated region
        $region17: #{run.1} parent=11 // pred_check
          %p191 = pneg %p113
        $region18: #{run.1} parent=11 // pred_check_branch
          %193 = sbr.rel (%p191) target = $region20
        $region19: #{run.1} parent=11 // pred_region
          _
        $region20: #{run.1} parent=11 // pred_fallthru
          _
      $region12: #{run.1} parent=5 // pred_fallthru
        _
      %p194 = scmp.lt.s32.totalorder %s19, 2
      // Predicated region
      $region21: #{run.1} parent=5 // pred_check
        %p195 = pneg %p194
      $region22: #{run.1} parent=5 // pred_check_branch
        %197 = sbr.rel (%p195) target = $region24
      $region23: #{run.1} parent=5 // pred_region
        // Predicated region
        $region25: #{run.1} parent=23 // pred_check
          %p198 = pneg %p60
        $region26: #{run.1} parent=23 // pred_check_branch
          %200 = sbr.rel (%p198) target = $region28
        $region27: #{run.1} parent=23 // pred_region
          %s201 = sand.u32 %s50, 1
          %s202 = scalar_lea.sflag [#allocation3], %s201
          %s203 = sand.u32 %s50, 1
          %s204 = smul.addr %s203, 32
          %s205 = scalar_lea.vmem [#allocation5], %s204
          %s207 = ssub.s32 512, 512
          %208 = vsyncadd %s202, %s207
          %s209 = smul.addr %s19, 2
          %s210 = smul.addr %s209, 64
          %s211 = scalar_lea.hbm %s1, %s210
          %s212 = sshll.u32 %s205, 4
          %s213 = int_to_ptr.vmem [resolvable:$true] %s212
          %218 = dma.hbm_to_vmem [thread:$0]  %s211, 512, %s213, %s202, 256, 128, 8
        $region28: #{run.1} parent=23 // pred_fallthru
          _
        // Predicated region
        $region29: #{run.1} parent=23 // pred_check
          %p219 = pneg %p86
        $region30: #{run.1} parent=23 // pred_check_branch
          %221 = sbr.rel (%p219) target = $region32
        $region31: #{run.1} parent=23 // pred_region
          %s222 = sand.u32 %s76, 1
          %s223 = scalar_lea.sflag [#allocation7], %s222
          %s224 = sand.u32 %s76, 1
          %s225 = smul.addr %s224, 16
          %s226 = scalar_lea.vmem [#allocation6], %s225
          %s228 = ssub.s32 256, 256
          %229 = vsyncadd %s223, %s228
          %s230 = smul.addr %s19, 2
          %s231 = smul.addr %s230, 64
          %s232 = scalar_lea.hbm %s2, %s231
          %s233 = sshll.u32 %s226, 4
          %s234 = int_to_ptr.vmem [resolvable:$true] %s233
          %239 = dma.hbm_to_vmem [thread:$0]  %s232, 256, %s234, %s223, 256, 128, 8
        $region32: #{run.1} parent=23 // pred_fallthru
          _
      $region24: #{run.1} parent=5 // pred_fallthru
        _
      %p240 = scmp.le.s32.totalorder 1, %s19
      %p241 = scmp.lt.s32.totalorder %s19, 3
      %p242 = pnand %p240, %p241
      %p243 = pneg %p242
      // Predicated region
      $region33: #{run.1} parent=5 // pred_check
        _
      $region34: #{run.1} parent=5 // pred_check_branch
        %245 = sbr.rel (%p242) target = $region36
      $region35: #{run.1} parent=5 // pred_region
        %s246 = ssub.s32 %s19, 1
        // Predicated region
        $region37: #{run.1} parent=35 // pred_check
          %p247 = pneg %p40
        $region38: #{run.1} parent=35 // pred_check_branch
          %249 = sbr.rel (%p247) target = $region40
        $region39: #{run.1} parent=35 // pred_region
          %250 = dma.done [#allocation4], 16
        $region40: #{run.1} parent=35 // pred_fallthru
          _
        %s251 = sand.u32 %s53, 1
        %s252 = scalar_lea.sflag [#allocation3], %s251
        %s253 = sand.u32 %s53, 1
        %s254 = smul.addr %s253, 32
        %s255 = scalar_lea.vmem [#allocation5], %s254
        // Predicated region
        $region41: #{run.1} parent=35 // pred_check
          %p256 = pneg %p66
        $region42: #{run.1} parent=35 // pred_check_branch
          %258 = sbr.rel (%p256) target = $region44
        $region43: #{run.1} parent=35 // pred_region
          %259 = dma.done %s252, 512
        $region44: #{run.1} parent=35 // pred_fallthru
          _
        %s260 = sand.u32 %s79, 1
        %s261 = scalar_lea.sflag [#allocation7], %s260
        %s262 = sand.u32 %s79, 1
        %s263 = smul.addr %s262, 16
        %s264 = scalar_lea.vmem [#allocation6], %s263
        // Predicated region
        $region45: #{run.1} parent=35 // pred_check
          %p265 = pneg %p92
        $region46: #{run.1} parent=35 // pred_check_branch
          %267 = sbr.rel (%p265) target = $region48
        $region47: #{run.1} parent=35 // pred_region
          %268 = dma.done %s261, 256
        $region48: #{run.1} parent=35 // pred_fallthru
          _
        %269 = sfence
        %p270 = pneg %p40
        %p271 = pneg %p37
        %s272 = sand.u32 %s53, 1
        %s273 = scalar_lea.sflag [#allocation3], %s272
        %s274 = sand.u32 %s53, 1
        %s275 = smul.addr %s274, 32
        %s276 = scalar_lea.vmem [#allocation5], %s275
        %p277 = pneg %p66
        %p278 = pneg %p63
        %s279 = sand.u32 %s79, 1
        %s280 = scalar_lea.sflag [#allocation7], %s279
        %s281 = sand.u32 %s79, 1
        %s282 = smul.addr %s281, 16
        %s283 = scalar_lea.vmem [#allocation6], %s282
        %p284 = pneg %p92
        %p285 = pneg %p89
        %p286 = pneg %p113
        %p287 = pneg %p110
        %p288 = pneg %p139
        %p289 = pneg %p136
        %p290 = scmp.lt.s32.totalorder %s24, 1
        %s291 = scalar_select %p290, %s24, 1
        %s292 = smul.addr %s291, 8
        %s293 = scalar_lea.vmem %s4, %s292
        %p294 = pneg %p165
        %p295 = pneg %p162
        %p296 = scmp.lt.s32.totalorder %s24, 1
        %s297 = scalar_select %p296, %s24, 1
        %s298 = smul.addr %s297, 2
        %s299 = scalar_lea.vmem %s5, %s298
        %p300 = scmp.lt.s32.totalorder %s24, 1
        %s301 = scalar_select %p300, %s24, 1
        %s302 = smul.addr %s301, 8
        %s303 = scalar_lea.vmem %s4, %s302
        %p304 = scmp.lt.s32.totalorder %s24, 1
        %s305 = scalar_select %p304, %s24, 1
        %s306 = smul.addr %s305, 2
        %s307 = scalar_lea.vmem %s5, %s306
        %s308 = sld [smem:[#allocation2]]
        %s309 = sld [smem:[#allocation2 + $0x1]]
        %v310 = vld [vmem:[%s264] sm:$0xff]
        %v311 = vld [vmem:[%s264 + $0x8] sm:$0xff]
        %v312 = vunpack.c.l.bf16 %v310
        %v313 = vunpack.c.h.bf16 %v310
        %v314 = vunpack.c.l.bf16 %v311
        %v315 = vunpack.c.h.bf16 %v311
        %v316 = vld [vmem:[%s3] sm:$0x3]
        %v318 = vlaneseq
        %v319 = vshrl.u32 %v318, 7
        %v320 = vsub.s32 0, %v319
        %v321 = vrot.slane %v316, %v320
        %v322 = vlaneseq
        %v323 = vshrl.u32 %v322, 7
        %v324 = vsub.s32 1, %v323
        %v325 = vrot.slane %v316, %v324
        %v328 = vsub.f32 %v312, %v321
        %v329 = vsub.f32 %v313, %v325
        %v330 = vsub.f32 %v314, %v321
        %v331 = vsub.f32 %v315, %v325
        %v332 = vstv %s309
        %v333 = vmul.f32 %v328, %v332
        %v334 = vmul.f32 %v329, %v332
        %v335 = vmul.f32 %v330, %v332
        %v336 = vmul.f32 %v331, %v332
        %v337 = vmax.f32 %v333, %v334
        %338 = vmax.xlane.f32.xlu0 %v337
        %v339 = vpop.xlane.xlu0 %338
        %v340 = vmax.f32 %v335, %v336
        %341 = vmax.xlane.f32.xlu0 %v340
        %v342 = vpop.xlane.xlu0 %341
        %v343 = vsub.f32 %v333, %v339
        %v344 = vsub.f32 %v334, %v339
        %v345 = vsub.f32 %v335, %v342
        %v346 = vsub.f32 %v336, %v342
        %v347 = vmul.f32 %v343, 1.442695
        %v348 = vpow.pop %v347
        %v349 = vmul.f32 %v344, 1.442695
        %v350 = vpow.pop %v349
        %v351 = vmul.f32 %v345, 1.442695
        %v352 = vpow.pop %v351
        %v353 = vmul.f32 %v346, 1.442695
        %v354 = vpow.pop %v353
        %v355 = vadd.f32 %v348, %v350
        %356 = vadd.xlane.f32.xlu0 %v355
        %v357 = vpop.xlane.xlu0 %356
        %v358 = vadd.f32 %v352, %v354
        %359 = vadd.xlane.f32.xlu0 %v358
        %v360 = vpop.xlane.xlu0 %359
        %v361 = vrcp.pop %v357
        %v362 = vrcp.pop %v360
        %v363 = vmul.f32 %v348, %v361
        %v364 = vmul.f32 %v350, %v361
        %v365 = vmul.f32 %v352, %v362
        %v366 = vmul.f32 %v354, %v362
        %v367 = vld [vmem:[%s255] sm:$0xff]
        %v368 = vld [vmem:[%s255 + $0x8] sm:$0xff]
        %v369 = vld [vmem:[%s255 + $0x10] sm:$0xff]
        %v370 = vld [vmem:[%s255 + $0x18] sm:$0xff]
        %v371 = vunpack.c.l.bf16 %v367
        %v372 = vunpack.c.h.bf16 %v367
        %v373 = vunpack.c.l.bf16 %v368
        %v374 = vunpack.c.h.bf16 %v368
        %v375 = vunpack.c.l.bf16 %v369
        %v376 = vunpack.c.h.bf16 %v369
        %v377 = vunpack.c.l.bf16 %v370
        %v378 = vunpack.c.h.bf16 %v370
        %v379 = vstv %s308
        %v380 = vmul.f32 %v371, %v379
        %v381 = vmul.f32 %v372, %v379
        %v382 = vmul.f32 %v373, %v379
        %v383 = vmul.f32 %v374, %v379
        %v384 = vmul.f32 %v375, %v379
        %v385 = vmul.f32 %v376, %v379
        %v386 = vmul.f32 %v377, %v379
        %v387 = vmul.f32 %v378, %v379
        %v388 = vmax.f32 %v380, %v381
        %389 = vmax.xlane.f32.xlu0 %v388
        %v390 = vpop.xlane.xlu0 %389
        %v391 = vmax.f32 %v382, %v383
        %392 = vmax.xlane.f32.xlu0 %v391
        %v393 = vpop.xlane.xlu0 %392
        %v394 = vmax.f32 %v384, %v385
        %395 = vmax.xlane.f32.xlu0 %v394
        %v396 = vpop.xlane.xlu0 %395
        %v397 = vmax.f32 %v386, %v387
        %398 = vmax.xlane.f32.xlu0 %v397
        %v399 = vpop.xlane.xlu0 %398
        %v400 = vsub.f32 %v380, %v390
        %v401 = vsub.f32 %v381, %v390
        %v402 = vsub.f32 %v382, %v393
        %v403 = vsub.f32 %v383, %v393
        %v404 = vsub.f32 %v384, %v396
        %v405 = vsub.f32 %v385, %v396
        %v406 = vsub.f32 %v386, %v399
        %v407 = vsub.f32 %v387, %v399
        %v408 = vmul.f32 %v400, 1.442695
        %v409 = vpow.pop %v408
        %v410 = vmul.f32 %v401, 1.442695
        %v411 = vpow.pop %v410
        %v412 = vmul.f32 %v402, 1.442695
        %v413 = vpow.pop %v412
        %v414 = vmul.f32 %v403, 1.442695
        %v415 = vpow.pop %v414
        %v416 = vmul.f32 %v404, 1.442695
        %v417 = vpow.pop %v416
        %v418 = vmul.f32 %v405, 1.442695
        %v419 = vpow.pop %v418
        %v420 = vmul.f32 %v406, 1.442695
        %v421 = vpow.pop %v420
        %v422 = vmul.f32 %v407, 1.442695
        %v423 = vpow.pop %v422
        %v424 = vadd.f32 %v409, %v411
        %425 = vadd.xlane.f32.xlu0 %v424
        %v426 = vpop.xlane.xlu0 %425
        %v427 = vadd.f32 %v413, %v415
        %428 = vadd.xlane.f32.xlu0 %v427
        %v429 = vpop.xlane.xlu0 %428
        %v430 = vadd.f32 %v417, %v419
        %431 = vadd.xlane.f32.xlu0 %v430
        %v432 = vpop.xlane.xlu0 %431
        %v433 = vadd.f32 %v421, %v423
        %434 = vadd.xlane.f32.xlu0 %v433
        %v435 = vpop.xlane.xlu0 %434
        %v436 = vlog2.pop %v426
        %v437 = vmul.f32 %v436, 0.6931472
        %v438 = vlog2.pop %v429
        %v439 = vmul.f32 %v438, 0.6931472
        %v440 = vlog2.pop %v432
        %v441 = vmul.f32 %v440, 0.6931472
        %v442 = vlog2.pop %v435
        %v443 = vmul.f32 %v442, 0.6931472
        %v444 = vsub.f32 %v400, %v437
        %v445 = vsub.f32 %v401, %v437
        %v446 = vsub.f32 %v402, %v439
        %v447 = vsub.f32 %v403, %v439
        %v448 = vsub.f32 %v404, %v441
        %v449 = vsub.f32 %v405, %v441
        %v450 = vsub.f32 %v406, %v443
        %v451 = vsub.f32 %v407, %v443
        %v452 = vadd.f32 %v444, %v446
        %v453 = vadd.f32 %v445, %v447
        %v454 = vadd.f32 %v452, %v448
        %v455 = vadd.f32 %v453, %v449
        %v456 = vadd.f32 %v454, %v450
        %v457 = vadd.f32 %v455, %v451
        %v458 = vsub.f32 %v456, %v444
        %v459 = vsub.f32 %v457, %v445
        %v460 = vmul.f32 %v363, %v458
        %v461 = vmul.f32 %v364, %v459
        %v462 = vadd.f32 %v460, %v461
        %463 = vadd.xlane.f32.xlu0 %v462
        %v464 = vpop.xlane.xlu0 %463
        %v465 = vsub.f32 %v456, %v446
        %v466 = vsub.f32 %v457, %v447
        %v467 = vmul.f32 %v365, %v465
        %v468 = vmul.f32 %v366, %v466
        %v469 = vadd.f32 %v467, %v468
        %470 = vadd.xlane.f32.xlu0 %v469
        %v471 = vpop.xlane.xlu0 %470
        %v472 = vadd.f32 %v464, %v471
        %v473 = vsub.f32 0.0, %v472
        %v474 = vmul.f32 %v473, 0.16666667
        %vm475 = vcmask 7168
        %476 = vst.msk [vmem:[%s303] sm:$0xff] %vm475, %v474
        %v477 = vadd.f32 %v312, %v314
        %v478 = vadd.f32 %v313, %v315
        %v479 = vrot.slane %v477, 4
        %v480 = vadd.f32 %v477, %v479
        %v481 = vrot.slane %v480, 2
        %v482 = vadd.f32 %v480, %v481
        %v483 = vrot.slane %v482, 1
        %v484 = vadd.f32 %v482, %v483
        %v485 = vrot.slane %v478, 4
        %v486 = vadd.f32 %v478, %v485
        %v487 = vrot.slane %v486, 2
        %v488 = vadd.f32 %v486, %v487
        %v489 = vrot.slane %v488, 1
        %v490 = vadd.f32 %v488, %v489
        %v493 = vcombine.low %v484, %v490
        %v495 = vunpack.c.l.s4 1966171168
        %v496 = vunpack.c.0.s8 %v495
        %v497 = vlaneseq
        %v498 = vshrl.u32 %v497, 7
        %v499 = vsub.s32 %v496, %v498
        %v500 = vrot.slane %v493, %v499
        %v502 = vunpack.c.l.s4 1966171168
        %v503 = vunpack.c.0.s8 %v502
        %v504 = vlaneseq
        %v505 = vshrl.u32 %v504, 7
        %v506 = vsub.s32 %v503, %v505
        %v507 = vrot.slane %v500, %v506
        %v509 = vlaneseq
        %vm510 = vcmp.ge.s32.totalorder %v509, 0
        %vm511 = vcmp.lt.s32.totalorder %v509, 256
        %vm512 = vmand %vm510, %vm511
        %513 = vst.msk [vmem:[%s307] sm:$0x3] %vm512, %v507
        %p514 = scmp.lt.s32.totalorder %s24, 1
        %s515 = scalar_select %p514, %s24, 1
        %s516 = smul.addr %s515, 8
        %s517 = scalar_lea.vmem %s4, %s516
        %p518 = scmp.lt.s32.totalorder %s24, 1
        %s519 = scalar_select %p518, %s24, 1
        %s520 = smul.addr %s519, 2
        %s521 = scalar_lea.vmem %s5, %s520
        // Predicated region
        $region49: #{run.1} parent=35 // pred_check
          %p522 = pneg %p136
        $region50: #{run.1} parent=35 // pred_check_branch
          %524 = sbr.rel (%p522) target = $region52
        $region51: #{run.1} parent=35 // pred_region
          _
        $region52: #{run.1} parent=35 // pred_fallthru
          _
        // Predicated region
        $region53: #{run.1} parent=35 // pred_check
          %p525 = pneg %p162
        $region54: #{run.1} parent=35 // pred_check_branch
          %527 = sbr.rel (%p525) target = $region56
        $region55: #{run.1} parent=35 // pred_region
          _
        $region56: #{run.1} parent=35 // pred_fallthru
          _
      $region36: #{run.1} parent=5 // pred_fallthru
        _
      %p528 = scmp.le.s32.totalorder 2, %s19
      // Predicated region
      $region57: #{run.1} parent=5 // pred_check
        %p529 = pneg %p528
      $region58: #{run.1} parent=5 // pred_check_branch
        %531 = sbr.rel (%p529) target = $region60
      $region59: #{run.1} parent=5 // pred_region
        %s532 = ssub.s32 %s19, 2
        // Predicated region
        $region61: #{run.1} parent=59 // pred_check
          %p533 = pneg %p142
        $region62: #{run.1} parent=59 // pred_check_branch
          %535 = sbr.rel (%p533) target = $region64
        $region63: #{run.1} parent=59 // pred_region
          %p536 = scmp.lt.s32.totalorder %s25, 1
          %s537 = scalar_select %p536, %s25, 1
          %s538 = smul.addr %s537, 8
          %s539 = scalar_lea.vmem %s4, %s538
        $region64: #{run.1} parent=59 // pred_fallthru
          _
        // Predicated region
        $region65: #{run.1} parent=59 // pred_check
          %p540 = pneg %p168
        $region66: #{run.1} parent=59 // pred_check_branch
          %542 = sbr.rel (%p540) target = $region68
        $region67: #{run.1} parent=59 // pred_region
          %p543 = scmp.lt.s32.totalorder %s25, 1
          %s544 = scalar_select %p543, %s25, 1
          %s545 = smul.addr %s544, 2
          %s546 = scalar_lea.vmem %s5, %s545
        $region68: #{run.1} parent=59 // pred_fallthru
          _
      $region60: #{run.1} parent=5 // pred_fallthru
        _
    $region6: #{run.1} parent=1 // loop_footer
      %s23 = sadd.s32 1, %s19
    $region7: #{run.1} parent=1 // loop_footer_branch
      %18 = sbr.rel target = $region3
    $region8: #{run.1} parent=1 // loop_exit
      _
    %547 = vsyncpa [#allocation3], 1
    %s548 = scalar_lea.sflag [#allocation3], 1
    %549 = vsyncpa %s548, 1
    %550 = vsyncpa [#allocation7], 1
    %s551 = scalar_lea.sflag [#allocation7], 1
    %552 = vsyncpa %s551, 1
    %553 = vsyncpa [#allocation4], 1
    %s554 = scalar_lea.sflag [#allocation4], 1
    %555 = vsyncpa %s554, 1

</llo_original>
